<compile_context>
chip_gen: v7x
topology: tpu7x:2x2x1
jax: 0.10.0
libtpu: 0.0.40
codegen_flags: <defaults>
</compile_context>

<pallas_src>
import functools

import jax
import jax.numpy as jnp
from jax.experimental import pallas as pl
from jax.experimental.pallas import tpu as pltpu


def _round_up(x, m):
    return ((x + m - 1) // m) * m


def _mlp_decoder_kernel(z_ref, w1_ref, b1_ref, w2t_ref, b2t_ref, o_ref):
    # hidden = relu(z @ W1 + b1); MXU accumulates in f32, epilogue stays f32
    # (keeps the VPU path f32 -> also correct on v5e which has no bf16 VALU).
    h = jnp.dot(z_ref[...], w1_ref[...], preferred_element_type=jnp.float32)
    h = jnp.maximum(h + b1_ref[...], 0.0)                         # (TM, 32) f32
    # Lane-dense transposed output: o^T = W2^T @ h^T -> (8, TM).
    # dot_general contracting (1,1) == pl.dot(w2t, h, trans_b=True).
    o_t = jax.lax.dot_general(
        w2t_ref[...], h.astype(w2t_ref.dtype),
        dimension_numbers=(((1,), (1,)), ((), ())),
        preferred_element_type=jnp.float32)
    o_ref[...] = o_t + b2t_ref[...]                                # (8, TM) + (8, 1)


def make_decoder_forward(w1, b1, w2, b2, *,
                         compute_dtype=jnp.bfloat16, block_rows=8192):
    """Prepare weights once and return a jitted forward: z (..., 64) -> (..., 7).

    w1: (model_dim, hidden), b1: (hidden,) or (1, hidden),
    w2: (hidden, output_dim), b2: (output_dim,) or (1, output_dim).
    """
    model_dim, hidden_dim = w1.shape
    output_dim = w2.shape[-1]
    out_pad = _round_up(output_dim, 8)          # full-sublane output block (7 -> 8)

    # One-time weight prep (hoisted out of the per-call path).
    w1_c = jnp.asarray(w1, compute_dtype)                                   # (64, 32)
    b1_row = jnp.reshape(jnp.asarray(b1, jnp.float32), (1, hidden_dim))     # (1, 32)
    w2_t = jnp.zeros((out_pad, hidden_dim), compute_dtype).at[:output_dim].set(
        jnp.transpose(jnp.asarray(w2, compute_dtype)))                      # (8, 32)
    b2_col = jnp.zeros((out_pad, 1), jnp.float32).at[:output_dim, 0].set(
        jnp.reshape(jnp.asarray(b2, jnp.float32), (-1,)))                   # (8, 1)

    def forward(z):
        lead_shape = z.shape[:-1]
        z2d = z.reshape(-1, model_dim).astype(compute_dtype)
        n_rows = z2d.shape[0]

        # Row tile: multiple of 128 (lane-dense transposed output), capped by
        # block_rows for VMEM, and sized so there are >=2 grid steps when the
        # problem allows it (v7x dual-TC sharding of the "parallel" axis).
        tm = min(block_rows, max(128, _round_up(-(-n_rows // 2), 128)))
        n_tiles = pl.cdiv(n_rows, tm)

        out_t = pl.pallas_call(
            _mlp_decoder_kernel,
            out_shape=jax.ShapeDtypeStruct((out_pad, n_rows), jnp.float32),
            grid=(n_tiles,),
            in_specs=[
                pl.BlockSpec((tm, model_dim), lambda i: (i, 0)),           # z (streams)
                pl.BlockSpec((model_dim, hidden_dim), lambda i: (0, 0)),   # W1 (resident)
                pl.BlockSpec((1, hidden_dim), lambda i: (0, 0)),           # b1 (resident)
                pl.BlockSpec((out_pad, hidden_dim), lambda i: (0, 0)),     # W2^T (resident)
                pl.BlockSpec((out_pad, 1), lambda i: (0, 0)),              # b2 (resident)
            ],
            out_specs=pl.BlockSpec((out_pad, tm), lambda i: (0, i)),       # lane-dense
            compiler_params=pltpu.CompilerParams(
                dimension_semantics=("parallel",),
                vmem_limit_bytes=32 * 1024 * 1024),
        )(z2d, w1_c, b1_row, w2_t, b2_col)

        # Drop the out-dim pad row and return the natural (rows, out_dim) layout.
        # Under jit this slice+transpose fuses with the downstream consumer.
        out = out_t[:output_dim, :].T
        return out.reshape(*lead_shape, output_dim)

    return jax.jit(forward)


def init_params(model_dim=64, hidden_dim=32, output_dim=7, seed=0):
    """Deterministic PyTorch-Linear-style init: U(-1/sqrt(fan_in), 1/sqrt(fan_in))."""
    k = jax.random.PRNGKey(seed)
    k1, k2, k3, k4 = jax.random.split(k, 4)
    lim1 = 1.0 / jnp.sqrt(model_dim)
    lim2 = 1.0 / jnp.sqrt(hidden_dim)
    # stored as [in_features, out_features] (transpose of torch's weight layout)
    w1 = jax.random.uniform(k1, (model_dim, hidden_dim), jnp.float32, -lim1, lim1)
    b1 = jax.random.uniform(k2, (1, hidden_dim), jnp.float32, -lim1, lim1)
    w2 = jax.random.uniform(k3, (hidden_dim, output_dim), jnp.float32, -lim2, lim2)
    b2 = jax.random.uniform(k4, (1, output_dim), jnp.float32, -lim2, lim2)
    return w1, b1, w2, b2


if __name__ == "__main__":
    model_dim, hidden_dim, output_dim = 64, 32, 7
    w1, b1, w2, b2 = init_params(model_dim, hidden_dim, output_dim, seed=0)

    def ref_fn(zz):
        h = jnp.maximum(zz.reshape(-1, model_dim) @ w1 + b1, 0.0)
        return (h @ w2 + b2).reshape(*zz.shape[:-1], output_dim)

    # 1) Default (bf16 MXU inputs, f32 accumulate): small shape, single tile.
    fwd_bf16 = make_decoder_forward(w1, b1, w2, b2)
    z = jax.random.normal(jax.random.PRNGKey(0), (2, 8, model_dim), jnp.float32)
    out = jax.block_until_ready(fwd_bf16(z))
    assert out.shape == (2, 8, output_dim)
    assert jnp.allclose(out, ref_fn(z), atol=2e-2, rtol=2e-2)

    # 2) Exact-f32 path, 2 tiles with a partial (masked) last block: 185 rows, tm=128.
    fwd_f32 = make_decoder_forward(w1, b1, w2, b2,
                                   compute_dtype=jnp.float32, block_rows=128)
    z2 = jax.random.normal(jax.random.PRNGKey(1), (5, 37, model_dim), jnp.float32)
    out2 = jax.block_until_ready(fwd_f32(z2))
    assert out2.shape == (5, 37, output_dim)
    assert jnp.allclose(out2, ref_fn(z2), atol=2e-5, rtol=2e-5)

    # 3) Exact-f32 path, 3 full tiles (resident weights across grid steps, parallel axis).
    z3 = jax.random.normal(jax.random.PRNGKey(2), (3, 128, model_dim), jnp.float32)
    out3 = jax.block_until_ready(fwd_f32(z3))
    assert out3.shape == (3, 128, output_dim)
    assert jnp.allclose(out3, ref_fn(z3), atol=2e-5, rtol=2e-5)

    print("KERNEL_OK")
</pallas_src>

<mosaic_0001>
module attributes {stable_mosaic.version = 11 : i64} {
  func.func @_mlp_decoder_kernel(%arg0: i32, %arg1: memref<128x64xbf16, #tpu.memory_space<vmem>>, %arg2: memref<64x32xbf16, #tpu.memory_space<vmem>>, %arg3: memref<1x32xf32, #tpu.memory_space<vmem>>, %arg4: memref<8x32xbf16, #tpu.memory_space<vmem>>, %arg5: memref<8x1xf32, #tpu.memory_space<vmem>>, %arg6: memref<8x128xf32, #tpu.memory_space<vmem>>) attributes {dimension_semantics = [#tpu.dimension_semantics<parallel>], iteration_bounds = array<i64: 1>, scalar_prefetch = 0 : i64, scratch_operands = 0 : i64, tpu.core_type = #tpu.core_type<tc>, window_params = [{transform_indices = @transform_0, window_bounds = array<i64: 128, 64>}, {pipeline_mode = #tpu.pipeline_mode<synchronous>, transform_indices = @transform_1, window_bounds = array<i64: 64, 32>}, {pipeline_mode = #tpu.pipeline_mode<synchronous>, transform_indices = @transform_2, window_bounds = array<i64: 1, 32>}, {pipeline_mode = #tpu.pipeline_mode<synchronous>, transform_indices = @transform_3, window_bounds = array<i64: 8, 32>}, {pipeline_mode = #tpu.pipeline_mode<synchronous>, transform_indices = @transform_4, window_bounds = array<i64: 8, 1>}, {transform_indices = @transform_5, window_bounds = array<i64: 8, 128>}]} {
    %c0 = arith.constant 0 : index
    %c0_0 = arith.constant 0 : index
    %0 = vector.load %arg1[%c0, %c0_0] : memref<128x64xbf16, #tpu.memory_space<vmem>>, vector<128x64xbf16>
    %c0_1 = arith.constant 0 : index
    %c0_2 = arith.constant 0 : index
    %1 = vector.load %arg2[%c0_1, %c0_2] : memref<64x32xbf16, #tpu.memory_space<vmem>>, vector<64x32xbf16>
    %cst = arith.constant dense<0.000000e+00> : vector<128x32xf32>
    %2 = tpu.matmul %0, %1, %cst {dimension_numbers = #tpu.dot_dimension_numbers<[1], [0], [0], [1], [0, 0, 1, 1], [], []>} : vector<128x64xbf16>, vector<64x32xbf16>, vector<128x32xf32> -> vector<128x32xf32>
    %c0_3 = arith.constant 0 : index
    %c0_4 = arith.constant 0 : index
    %3 = vector.load %arg3[%c0_3, %c0_4] : memref<1x32xf32, #tpu.memory_space<vmem>>, vector<1x32xf32>
    %4 = vector.broadcast %3 : vector<1x32xf32> to vector<128x32xf32>
    %5 = arith.addf %2, %4 : vector<128x32xf32>
    %cst_5 = arith.constant 0.000000e+00 : f32
    %6 = vector.broadcast %cst_5 : f32 to vector<128x32xf32>
    %7 = arith.maximumf %5, %6 : vector<128x32xf32>
    %c0_6 = arith.constant 0 : index
    %c0_7 = arith.constant 0 : index
    %8 = vector.load %arg4[%c0_6, %c0_7] : memref<8x32xbf16, #tpu.memory_space<vmem>>, vector<8x32xbf16>
    %9 = arith.truncf %7 : vector<128x32xf32> to vector<128x32xbf16>
    %cst_8 = arith.constant dense<0.000000e+00> : vector<8x128xf32>
    %10 = tpu.matmul %8, %9, %cst_8 {dimension_numbers = #tpu.dot_dimension_numbers<[1], [1], [0], [0], [0, 0, 1, 0], [], []>} : vector<8x32xbf16>, vector<128x32xbf16>, vector<8x128xf32> -> vector<8x128xf32>
    %c0_9 = arith.constant 0 : index
    %c0_10 = arith.constant 0 : index
    %11 = vector.load %arg5[%c0_9, %c0_10] : memref<8x1xf32, #tpu.memory_space<vmem>>, vector<8x1xf32>
    %12 = vector.broadcast %11 : vector<8x1xf32> to vector<8x128xf32>
    %13 = arith.addf %10, %12 : vector<8x128xf32>
    %c0_11 = arith.constant 0 : index
    %c0_12 = arith.constant 0 : index
    %14 = vector.load %arg6[%c0_11, %c0_12] : memref<8x128xf32, #tpu.memory_space<vmem>>, vector<8x128xf32>
    tpu.vector_store %arg6[%c0_11, %c0_12], %13 {strides = array<i32>} : memref<8x128xf32, #tpu.memory_space<vmem>>, vector<8x128xf32>,
    return
  }
  func.func @transform_0(%arg0: i32) -> (i32, i32) {
    %c0_i32 = arith.constant 0 : i32
    %c0_i32_0 = arith.constant 0 : i32
    return %arg0, %c0_i32 : i32, i32
  }
  func.func @transform_1(%arg0: i32) -> (i32, i32) {
    %c0_i32 = arith.constant 0 : i32
    %c0_i32_0 = arith.constant 0 : i32
    %c0_i32_1 = arith.constant 0 : i32
    return %c0_i32, %c0_i32_0 : i32, i32
  }
  func.func @transform_2(%arg0: i32) -> (i32, i32) {
    %c0_i32 = arith.constant 0 : i32
    %c0_i32_0 = arith.constant 0 : i32
    %c0_i32_1 = arith.constant 0 : i32
    return %c0_i32, %c0_i32_0 : i32, i32
  }
  func.func @transform_3(%arg0: i32) -> (i32, i32) {
    %c0_i32 = arith.constant 0 : i32
    %c0_i32_0 = arith.constant 0 : i32
    %c0_i32_1 = arith.constant 0 : i32
    return %c0_i32, %c0_i32_0 : i32, i32
  }
  func.func @transform_4(%arg0: i32) -> (i32, i32) {
    %c0_i32 = arith.constant 0 : i32
    %c0_i32_0 = arith.constant 0 : i32
    %c0_i32_1 = arith.constant 0 : i32
    return %c0_i32, %c0_i32_0 : i32, i32
  }
  func.func @transform_5(%arg0: i32) -> (i32, i32) {
    %c0_i32 = arith.constant 0 : i32
    %c0_i32_0 = arith.constant 0 : i32
    return %c0_i32, %arg0 : i32, i32
  }
}

</mosaic_0001>

<llo_original>
// kernel: forward.1
$region0: #{forward.1}
  #allocation0 [shape = 'u32[]', space=smem, size = 0x4, offset = 0x4, fixed_abs, tag = 'smem constant byte address 0x4 - core index']
  #allocation1 [shape = 'u32[144,128]{1,0:T(1,128)}', space=vmem, size = 0x12000, scoped, tag = 'internal scratch']
  %s0 = inlined_call_operand.vmem [shape: bf16[16,64], index: 0, kind: input, shape index: {}]
  %s1 = inlined_call_operand.vmem [shape: bf16[64,32], index: 1, kind: input, shape index: {}]
  %s2 = inlined_call_operand.vmem [shape: f32[1,32], index: 2, kind: input, shape index: {}]
  %s3 = inlined_call_operand.hbm [shape: bf16[8,32], index: 3, kind: input, shape index: {}]
  %s4 = inlined_call_operand.vmem [shape: f32[8,1], index: 4, kind: input, shape index: {}]
  %s5 = inlined_call_operand.vmem [shape: f32[8,16], index: 5, kind: output, shape index: {}]
  %s6 = sld [smem:[#allocation0]]
  $region34: #{forward.1} parent=0
    _
  %s8 = ssub.s32 1, %s6
  %s9 = scalar_select 0, %s8, %s6
  $region1: #{forward.1} parent=0
    #allocation2 [shape = 'u8[2048]{0}', space=vmem, size = 0x800, scoped, tag = 'input window, operand 3, single buffered']
    #allocation3 [shape = 's32[1]{0}', space=sflag, size = 0x4, scoped, tag = 'scoped memory for forward.1']
    %10 = vsyncpa [#allocation3], 0
    // Predicated region
    $region2: #{forward.1} parent=1 // pred_check
      _
    $region3: #{forward.1} parent=1 // pred_check_branch
      %12 = sbr.rel (0) target = $region5
    $region4: #{forward.1} parent=1 // pred_region
      _
    $region5: #{forward.1} parent=1 // pred_fallthru
      _
    // Predicated region
    $region6: #{forward.1} parent=1 // pred_check
      _
    $region7: #{forward.1} parent=1 // pred_check_branch
      %14 = sbr.rel (0) target = $region9
    $region8: #{forward.1} parent=1 // pred_region
      _
    $region9: #{forward.1} parent=1 // pred_fallthru
      _
    // Predicated region
    $region10: #{forward.1} parent=1 // pred_check
      _
    $region11: #{forward.1} parent=1 // pred_check_branch
      %16 = sbr.rel (0) target = $region13
    $region12: #{forward.1} parent=1 // pred_region
      _
    $region13: #{forward.1} parent=1 // pred_fallthru
      _
    // Predicated region
    $region14: #{forward.1} parent=1 // pred_check
      _
    $region15: #{forward.1} parent=1 // pred_check_branch
      %18 = sbr.rel (0) target = $region17
    $region16: #{forward.1} parent=1 // pred_region
      %s20 = ssub.s32 64, 64
      %21 = vsyncadd [#allocation3], %s20
      %s23 = sshll.u32 [#allocation2], 4
      %s24 = int_to_ptr.vmem [resolvable:$true] %s23
      %26 = dma.hbm_to_vmem [thread:$0]  %s3, 64, %s24, [#allocation3]
    $region17: #{forward.1} parent=1 // pred_fallthru
      _
    // Predicated region
    $region18: #{forward.1} parent=1 // pred_check
      _
    $region19: #{forward.1} parent=1 // pred_check_branch
      %28 = sbr.rel (0) target = $region21
    $region20: #{forward.1} parent=1 // pred_region
      _
    $region21: #{forward.1} parent=1 // pred_fallthru
      _
    // Predicated region
    $region22: #{forward.1} parent=1 // pred_check
      _
    $region23: #{forward.1} parent=1 // pred_check_branch
      %30 = sbr.rel (0) target = $region25
    $region24: #{forward.1} parent=1 // pred_region
      %31 = dma.done [#allocation3], 64
    $region25: #{forward.1} parent=1 // pred_fallthru
      _
    %v33 = vld [vmem:[%s0] sm:$0xf]
    %v34 = vld [vmem:[%s0 + $0x4] sm:$0xf]
    %v35 = vld [vmem:[%s0 + $0x8] sm:$0xf]
    %v36 = vld [vmem:[%s0 + $0xc] sm:$0xf]
    %v37 = vld [vmem:[%s0 + $0x10] sm:$0xf]
    %v38 = vld [vmem:[%s0 + $0x14] sm:$0xf]
    %v39 = vld [vmem:[%s0 + $0x18] sm:$0xf]
    %v40 = vld [vmem:[%s0 + $0x1c] sm:$0xf]
    %v41 = vld [vmem:[%s0 + $0x20] sm:$0xf]
    %v42 = vld [vmem:[%s0 + $0x24] sm:$0xf]
    %v43 = vld [vmem:[%s0 + $0x28] sm:$0xf]
    %v44 = vld [vmem:[%s0 + $0x2c] sm:$0xf]
    %v45 = vld [vmem:[%s0 + $0x30] sm:$0xf]
    %v46 = vld [vmem:[%s0 + $0x34] sm:$0xf]
    %v47 = vld [vmem:[%s0 + $0x38] sm:$0xf]
    %v48 = vld [vmem:[%s0 + $0x3c] sm:$0xf]
    %v49 = vld [vmem:[%s1] sm:$0xf]
    %v50 = vld [vmem:[%s1 + $0x4] sm:$0xf]
    %v51 = vld [vmem:[%s1 + $0x8] sm:$0xf]
    %v52 = vld [vmem:[%s1 + $0xc] sm:$0xf]
    %v53 = vld [vmem:[%s1 + $0x10] sm:$0xf]
    %v54 = vld [vmem:[%s1 + $0x14] sm:$0xf]
    %v55 = vld [vmem:[%s1 + $0x18] sm:$0xf]
    %v56 = vld [vmem:[%s1 + $0x1c] sm:$0xf]
    %v57 = vld [vmem:[%s2] sm:$0x1]
    %v59 = vlaneseq
    %v60 = vshrl.u32 %v59, 7
    %v61 = vsub.s32 0, %v60
    %v62 = vrot.slane %v57, %v61
    %v80 = vunpack.c.l.b16 %v33
    %v81 = vunpack.c.l.b16 %v34
    %v82 = vunpack.c.l.b16 %v35
    %v83 = vunpack.c.l.b16 %v36
    %v84 = vunpack.c.l.b16 %v37
    %v85 = vunpack.c.l.b16 %v38
    %v86 = vunpack.c.l.b16 %v39
    %v87 = vunpack.c.l.b16 %v40
    %v88 = vunpack.c.l.b16 %v41
    %v89 = vunpack.c.l.b16 %v42
    %v90 = vunpack.c.l.b16 %v43
    %v91 = vunpack.c.l.b16 %v44
    %v92 = vunpack.c.l.b16 %v45
    %v93 = vunpack.c.l.b16 %v46
    %v94 = vunpack.c.l.b16 %v47
    %v95 = vunpack.c.l.b16 %v48
    %v96 = vpack.c.b16 %v81, %v80
    %v97 = vpack.c.b16 %v83, %v82
    %v98 = vpack.c.b16 %v85, %v84
    %v99 = vpack.c.b16 %v87, %v86
    %v100 = vpack.c.b16 %v89, %v88
    %v101 = vpack.c.b16 %v91, %v90
    %v102 = vpack.c.b16 %v93, %v92
    %v103 = vpack.c.b16 %v95, %v94
    %v112 = vunpack.c.l.b16 %v49
    %v113 = vunpack.c.l.b16 %v50
    %v114 = vunpack.c.l.b16 %v51
    %v115 = vunpack.c.l.b16 %v52
    %v116 = vunpack.c.l.b16 %v53
    %v117 = vunpack.c.l.b16 %v54
    %v118 = vunpack.c.l.b16 %v55
    %v119 = vunpack.c.l.b16 %v56
    %v120 = vpack.c.b16 %v113, %v112
    %v121 = vpack.c.b16 %v115, %v114
    %v122 = vpack.c.b16 %v117, %v116
    %v123 = vpack.c.b16 %v119, %v118
    %vm128 = vcmask 523264
    %v130 = vsel %vm128, %v96, 0
    %v133 = vsel %vm128, %v97, 0
    %v136 = vsel %vm128, %v98, 0
    %v139 = vsel %vm128, %v99, 0
    %v142 = vsel %vm128, %v100, 0
    %v145 = vsel %vm128, %v101, 0
    %v148 = vsel %vm128, %v102, 0
    %v151 = vsel %vm128, %v103, 0
    %153 = vmatprep.subr.bf16.mxu0 0
    %154 = vmatpush1.bf16.msra.mxu0 %v120
    %155 = vmatprep.subr.bf16.mxu0 0
    %156 = vmatpush1.bf16.msra.mxu0 %v121
    %157 = vmatprep.subr.bf16.mxu0 0
    %158 = vmatpush1.bf16.msra.mxu0 %v122
    %159 = vmatprep.subr.bf16.mxu0 0
    %160 = vmatpush1.bf16.msra.mxu0 %v123
    %161 = vmatprep.subr.bf16.mxu0 0
    %162 = vmatpush1.bf16.msra.mxu0 0
    %163 = vmatprep.subr.bf16.mxu0 0
    %164 = vmatpush1.bf16.msra.mxu0 0
    %165 = vmatprep.subr.bf16.mxu0 0
    %166 = vmatpush1.bf16.msra.mxu0 0
    %167 = vmatprep.subr.bf16.mxu0 0
    %168 = vmatpush1.bf16.msra.mxu0 0
    %169 = vmatprep.subr.bf16.mxu0 0
    %170 = vmatpush1.bf16.msra.mxu0 0
    %171 = vmatprep.subr.bf16.mxu0 0
    %172 = vmatpush1.bf16.msra.mxu0 0
    %173 = vmatprep.subr.bf16.mxu0 0
    %174 = vmatpush1.bf16.msra.mxu0 0
    %175 = vmatprep.subr.bf16.mxu0 0
    %176 = vmatpush1.bf16.msra.mxu0 0
    %177 = vmatprep.subr.bf16.mxu0 0
    %178 = vmatpush1.bf16.msra.mxu0 0
    %179 = vmatprep.subr.bf16.mxu0 0
    %180 = vmatpush1.bf16.msra.mxu0 0
    %181 = vmatprep.subr.bf16.mxu0 0
    %182 = vmatpush1.bf16.msra.mxu0 0
    %183 = vmatprep.subr.bf16.mxu0 0
    %184 = vmatpush1.bf16.msra.mxu0 0
    %185 = vmatprep.mubr.bf16.mxu0 0
    %186 = vmatmul.mubr.bf16.gmra.mrb[0].mxu0 %v130
    %v187 = vpop.f32.mrb[0].mxu0
    %v188 = vadd.f32 %v62, %v187
    %v189 = vpop.f32.mrb[0].mxu0
    %v190 = vpop.f32.mrb[0].mxu0
    %v191 = vadd.f32 %v62, %v190
    %v192 = vpop.f32.mrb[0].mxu0
    %193 = vmatprep.mubr.bf16.mxu0 0
    %194 = vmatmul.mubr.bf16.gmra.mrb[0].mxu0 %v133
    %v195 = vpop.f32.mrb[0].mxu0
    %v196 = vadd.f32 %v62, %v195
    %v197 = vpop.f32.mrb[0].mxu0
    %v198 = vpop.f32.mrb[0].mxu0
    %v199 = vadd.f32 %v62, %v198
    %v200 = vpop.f32.mrb[0].mxu0
    %201 = vmatprep.mubr.bf16.mxu0 0
    %202 = vmatmul.mubr.bf16.gmra.mrb[0].mxu0 %v136
    %v203 = vpop.f32.mrb[0].mxu0
    %v204 = vadd.f32 %v62, %v203
    %v205 = vpop.f32.mrb[0].mxu0
    %v206 = vpop.f32.mrb[0].mxu0
    %v207 = vadd.f32 %v62, %v206
    %v208 = vpop.f32.mrb[0].mxu0
    %209 = vmatprep.mubr.bf16.mxu0 0
    %210 = vmatmul.mubr.bf16.gmra.mrb[0].mxu0 %v139
    %v211 = vpop.f32.mrb[0].mxu0
    %v212 = vadd.f32 %v62, %v211
    %v213 = vpop.f32.mrb[0].mxu0
    %v214 = vpop.f32.mrb[0].mxu0
    %v215 = vadd.f32 %v62, %v214
    %v216 = vpop.f32.mrb[0].mxu0
    %217 = vmatprep.mubr.bf16.mxu0 0
    %218 = vmatmul.mubr.bf16.gmra.mrb[0].mxu0 %v142
    %v219 = vpop.f32.mrb[0].mxu0
    %v220 = vadd.f32 %v62, %v219
    %v221 = vpop.f32.mrb[0].mxu0
    %v222 = vpop.f32.mrb[0].mxu0
    %v223 = vadd.f32 %v62, %v222
    %v224 = vpop.f32.mrb[0].mxu0
    %225 = vmatprep.mubr.bf16.mxu0 0
    %226 = vmatmul.mubr.bf16.gmra.mrb[0].mxu0 %v145
    %v227 = vpop.f32.mrb[0].mxu0
    %v228 = vadd.f32 %v62, %v227
    %v229 = vpop.f32.mrb[0].mxu0
    %v230 = vpop.f32.mrb[0].mxu0
    %v231 = vadd.f32 %v62, %v230
    %v232 = vpop.f32.mrb[0].mxu0
    %233 = vmatprep.mubr.bf16.mxu0 0
    %234 = vmatmul.mubr.bf16.gmra.mrb[0].mxu0 %v148
    %v235 = vpop.f32.mrb[0].mxu0
    %v236 = vadd.f32 %v62, %v235
    %v237 = vpop.f32.mrb[0].mxu0
    %v238 = vpop.f32.mrb[0].mxu0
    %v239 = vadd.f32 %v62, %v238
    %v240 = vpop.f32.mrb[0].mxu0
    %241 = vmatprep.mubr.bf16.mxu0 0
    %242 = vmatmul.mubr.bf16.gmra.mrb[0].mxu0 %v151
    %v243 = vpop.f32.mrb[0].mxu0
    %v244 = vadd.f32 %v62, %v243
    %v245 = vpop.f32.mrb[0].mxu0
    %v246 = vpop.f32.mrb[0].mxu0
    %v247 = vadd.f32 %v62, %v246
    %v248 = vpop.f32.mrb[0].mxu0
    %249 = vdwg.mxu0
    %v250 = vmax.f32 %v188, 0.0
    %v251 = vmax.f32 %v191, 0.0
    %v252 = vmax.f32 %v196, 0.0
    %v253 = vmax.f32 %v199, 0.0
    %v254 = vmax.f32 %v204, 0.0
    %v255 = vmax.f32 %v207, 0.0
    %v256 = vmax.f32 %v212, 0.0
    %v257 = vmax.f32 %v215, 0.0
    %v258 = vmax.f32 %v220, 0.0
    %v259 = vmax.f32 %v223, 0.0
    %v260 = vmax.f32 %v228, 0.0
    %v261 = vmax.f32 %v231, 0.0
    %v262 = vmax.f32 %v236, 0.0
    %v263 = vmax.f32 %v239, 0.0
    %v264 = vmax.f32 %v244, 0.0
    %v265 = vmax.f32 %v247, 0.0
    %v266 = vld [vmem:[#allocation2] sm:$0xf]
    %v267 = vpack.c.bf16 %v251, %v250
    %v268 = vpack.c.bf16 %v253, %v252
    %v269 = vpack.c.bf16 %v255, %v254
    %v270 = vpack.c.bf16 %v257, %v256
    %v271 = vpack.c.bf16 %v259, %v258
    %v272 = vpack.c.bf16 %v261, %v260
    %v273 = vpack.c.bf16 %v263, %v262
    %v274 = vpack.c.bf16 %v265, %v264
    %v275 = vld [vmem:[%s4] sm:$0xff]
    %277 = vset.pattern.permute.xlu0 0
    %278 = vperm.xlu0 %277, %v275
    %v279 = vpop.permute.xlu0 %278
    %vm281 = vcmask 261120
    %v283 = vsel %vm281, %v266, 0
    %v286 = vsel %vm281, %v267, 0
    %v289 = vsel %vm281, %v268, 0
    %v292 = vsel %vm281, %v269, 0
    %v295 = vsel %vm281, %v270, 0
    %v298 = vsel %vm281, %v271, 0
    %v301 = vsel %vm281, %v272, 0
    %v304 = vsel %vm281, %v273, 0
    %v307 = vsel %vm281, %v274, 0
    %309 = vmatprep.subr.bf16.mxu0 0
    %310 = vmatpush1.bf16.xpose.msra.mxu0 %v286
    %311 = vmatprep.subr.bf16.mxu0 0
    %312 = vmatpush1.bf16.xpose.msra.mxu0 %v289
    %313 = vmatprep.subr.bf16.mxu0 0
    %314 = vmatpush1.bf16.xpose.msra.mxu0 %v292
    %315 = vmatprep.subr.bf16.mxu0 0
    %316 = vmatpush1.bf16.xpose.msra.mxu0 %v295
    %317 = vmatprep.subr.bf16.mxu0 0
    %318 = vmatpush1.bf16.xpose.msra.mxu0 %v298
    %319 = vmatprep.subr.bf16.mxu0 0
    %320 = vmatpush1.bf16.xpose.msra.mxu0 %v301
    %321 = vmatprep.subr.bf16.mxu0 0
    %322 = vmatpush1.bf16.xpose.msra.mxu0 %v304
    %323 = vmatprep.subr.bf16.mxu0 0
    %324 = vmatpush1.bf16.xpose.msra.mxu0 %v307
    %325 = vmatprep.subr.bf16.mxu0 0
    %326 = vmatpush1.bf16.xpose.msra.mxu0 0
    %327 = vmatprep.subr.bf16.mxu0 0
    %328 = vmatpush1.bf16.xpose.msra.mxu0 0
    %329 = vmatprep.subr.bf16.mxu0 0
    %330 = vmatpush1.bf16.xpose.msra.mxu0 0
    %331 = vmatprep.subr.bf16.mxu0 0
    %332 = vmatpush1.bf16.xpose.msra.mxu0 0
    %333 = vmatprep.subr.bf16.mxu0 0
    %334 = vmatpush1.bf16.xpose.msra.mxu0 0
    %335 = vmatprep.subr.bf16.mxu0 0
    %336 = vmatpush1.bf16.xpose.msra.mxu0 0
    %337 = vmatprep.subr.bf16.mxu0 0
    %338 = vmatpush1.bf16.xpose.msra.mxu0 0
    %339 = vmatprep.subr.bf16.mxu0 0
    %340 = vmatpush1.bf16.xpose.msra.mxu0 0
    %341 = vmatprep.mubr.bf16.mxu0 0
    %342 = vmatmul.mubr.bf16.gmra.mrb[0].mxu0 %v283
    %v343 = vpop.f32.mrb[0].mxu0
    %v344 = vadd.f32 %v279, %v343
    %v345 = vpop.f32.mrb[0].mxu0
    %v346 = vpop.f32.mrb[0].mxu0
    %v347 = vpop.f32.mrb[0].mxu0
    %348 = vdwg.mxu0
    %349 = vst [vmem:[%s5] sm:$0xff] %v344
    // Predicated region
    $region26: #{forward.1} parent=1 // pred_check
      _
    $region27: #{forward.1} parent=1 // pred_check_branch
      %351 = sbr.rel (0) target = $region29
    $region28: #{forward.1} parent=1 // pred_region
      _
    $region29: #{forward.1} parent=1 // pred_fallthru
      _
    // Predicated region
    $region30: #{forward.1} parent=1 // pred_check
      _
    $region31: #{forward.1} parent=1 // pred_check_branch
      %353 = sbr.rel (0) target = $region33
    $region32: #{forward.1} parent=1 // pred_region
      _
    $region33: #{forward.1} parent=1 // pred_fallthru
      _
    %354 = vsyncpa [#allocation3], 1

</llo_original>
